<compile_context>
chip_gen: v6e
topology: v6e:2x2x1
jax: 0.10.0
libtpu: 0.0.40
codegen_flags: <defaults>
</compile_context>

<pallas_src>
import jax
import jax.numpy as jnp
from jax.experimental import pallas as pl
from jax.experimental.pallas import tpu as pltpu


def _round_up(n, m):
    return ((n + m - 1) // m) * m


def _cdiv(a, b):
    return (a + b - 1) // b


def logistic_kernel(x_ref, w_ref, b_ref, o_ref):
    # x_ref: (TB, F) VMEM (streamed)   w_ref: (1, F) VMEM (resident)
    # b_ref: (1,) SMEM                 o_ref: (1, 1, TB) VMEM lane-dense output slab
    x = x_ref[...]                                   # (TB, F) f32
    w = w_ref[...]                                   # (1, F)  f32, broadcasts over rows
    logits = jnp.sum(x * w, axis=-1) + b_ref[0]      # VPU mul + row reduce, SMEM bias
    o_ref[...] = jax.nn.sigmoid(logits)[None, None, :].astype(o_ref.dtype)


def _choose_tb(B, F):
    """Rows per batch tile, sized by bytes rather than a fixed row count."""
    row_bytes = F * 4
    TARGET_TILE_BYTES = 4 << 20     # ~4 MiB per x tile amortizes the ~0.35us step cost
    MAX_TILE_BYTES = 12 << 20       # 24 MiB double-buffered -> fits v7x 64 MiB VMEM

    if B <= 128:
        return B                    # single tile; block dims equal full array dims

    tb = min(TARGET_TILE_BYTES // row_bytes, MAX_TILE_BYTES // row_bytes, B)
    if tb >= 128:
        tb = (tb // 128) * 128      # multiple of 128: unmasked lane-dense output vst
    else:
        tb = max(8, (tb // 8) * 8)  # wide-F derate; still satisfies (8,128) rule
        # TODO(synk): F-reduction grid axis for the truly wide-F case (see header).

    # Guarantee >= 2 batch tiles so the "parallel" grid axis can shard across both
    # TensorCores on v7x (no-op on single-TC v5e/v6e).
    if _cdiv(B, tb) < 2:
        tb = min(tb, _round_up(_cdiv(B, 2), 128))
    return max(tb, 8)


def logistic_regression(x, weight, bias):
    """x: (B, F) f32; weight: (1, F) f32 (PyTorch nn.Linear layout); bias: (1,) f32."""
    B, F = x.shape
    assert weight.shape == (1, F)
    assert bias.shape == (1,)

    tb = _choose_tb(B, F)
    num_tiles = _cdiv(B, tb)

    # Explicit scoped-VMEM budget: double-buffered x tiles + resident weight +
    # double-buffered output slab + slack.  (v5e default scoped limit is 16 MiB.)
    tile_bytes = tb * F * 4
    vmem_limit = 2 * tile_bytes + 2 * F * 4 + 2 * tb * 4 + (1 << 20)
    vmem_limit = int(min(max(vmem_limit, 4 << 20), 64 << 20))

    out = pl.pallas_call(
        logistic_kernel,
        out_shape=jax.ShapeDtypeStruct((num_tiles, 1, tb), jnp.float32),
        grid=(num_tiles,),
        in_specs=[
            # x streamed straight from HBM, no materialized pad: last dim is the full
            # feature extent; the ragged last batch tile is handled by Pallas (per-row
            # math only, and the out-of-range rows are sliced off below).
            pl.BlockSpec((tb, F), lambda i: (i, 0)),
            # Weight stays VMEM-resident across all grid steps.
            pl.BlockSpec((1, F), lambda i: (0, 0)),
            # Bias as an SMEM scalar (no padded VMEM tile / extra pipelined DMA).
            pl.BlockSpec(memory_space=pltpu.MemorySpace.SMEM),
        ],
        out_specs=pl.BlockSpec((1, 1, tb), lambda i: (i, 0, 0)),
        compiler_params=pltpu.CompilerParams(
            dimension_semantics=("parallel",),
            vmem_limit_bytes=vmem_limit,
        ),
    )(x, weight, bias)

    return out.reshape(num_tiles * tb)[:B].reshape(B, 1)


if __name__ == "__main__":
    key = jax.random.PRNGKey(0)
    kx, kw, kb = jax.random.split(key, 3)

    batch, in_features = 8, 32
    x = jax.random.normal(kx, (batch, in_features), dtype=jnp.float32)
    # Mimic nn.Linear's uniform(-1/sqrt(F), 1/sqrt(F)) init.
    bound = 1.0 / jnp.sqrt(jnp.float32(in_features))
    weight = jax.random.uniform(kw, (1, in_features), jnp.float32, -bound, bound)
    bias = jax.random.uniform(kb, (1,), jnp.float32, -bound, bound)

    out = logistic_regression(x, weight, bias)
    out = jax.block_until_ready(out)

    # Reference check in plain JAX.
    ref = jax.nn.sigmoid(x @ weight.T + bias)
    assert out.shape == (batch, 1)
    assert jnp.allclose(out, ref, atol=1e-5), "mismatch vs reference"

    print("KERNEL_OK")
</pallas_src>

<mosaic_0001>
module attributes {stable_mosaic.version = 11 : i64} {
  func.func @logistic_kernel(%arg0: i32, %arg1: memref<8x32xf32, #tpu.memory_space<vmem>>, %arg2: memref<1x32xf32, #tpu.memory_space<vmem>>, %arg3: memref<1xf32, #tpu.memory_space<smem>>, %arg4: memref<1x1x8xf32, #tpu.memory_space<vmem>>) attributes {dimension_semantics = [#tpu.dimension_semantics<parallel>], iteration_bounds = array<i64: 1>, scalar_prefetch = 0 : i64, scratch_operands = 0 : i64, tpu.core_type = #tpu.core_type<tc>, window_params = [{transform_indices = @transform_0, window_bounds = array<i64: 8, 32>}, {pipeline_mode = #tpu.pipeline_mode<synchronous>, transform_indices = @transform_1, window_bounds = array<i64: 1, 32>}, {transform_indices = @transform_2, window_bounds = array<i64: 1>}, {transform_indices = @transform_3, window_bounds = array<i64: 1, 1, 8>}]} {
    %c0 = arith.constant 0 : index
    %c0_0 = arith.constant 0 : index
    %0 = vector.load %arg1[%c0, %c0_0] : memref<8x32xf32, #tpu.memory_space<vmem>>, vector<8x32xf32>
    %c0_1 = arith.constant 0 : index
    %c0_2 = arith.constant 0 : index
    %1 = vector.load %arg2[%c0_1, %c0_2] : memref<1x32xf32, #tpu.memory_space<vmem>>, vector<1x32xf32>
    %2 = vector.broadcast %1 : vector<1x32xf32> to vector<8x32xf32>
    %3 = arith.mulf %0, %2 : vector<8x32xf32>
    %cst = arith.constant dense<0.000000e+00> : vector<8xf32>
    %4 = vector.multi_reduction <add>, %3, %cst [1] : vector<8x32xf32> to vector<8xf32>
    %c0_3 = arith.constant 0 : index
    %5 = memref.load %arg3[%c0_3] : memref<1xf32, #tpu.memory_space<smem>>
    %6 = vector.broadcast %5 : f32 to vector<8xf32>
    %7 = arith.addf %4, %6 : vector<8xf32>
    %8 = arith.negf %7 : vector<8xf32>
    %9 = math.exp %8 : vector<8xf32>
    %cst_4 = arith.constant 1.000000e+00 : f32
    %10 = vector.broadcast %cst_4 : f32 to vector<8xf32>
    %11 = arith.addf %10, %9 : vector<8xf32>
    %12 = arith.divf %10, %11 : vector<8xf32>
    %13 = vector.shape_cast %12 : vector<8xf32> to vector<1x1x8xf32>
    %c0_5 = arith.constant 0 : index
    %c0_6 = arith.constant 0 : index
    %c0_7 = arith.constant 0 : index
    %14 = vector.load %arg4[%c0_5, %c0_6, %c0_7] : memref<1x1x8xf32, #tpu.memory_space<vmem>>, vector<1x1x8xf32>
    tpu.vector_store %arg4[%c0_5, %c0_6, %c0_7], %13 {strides = array<i32>} : memref<1x1x8xf32, #tpu.memory_space<vmem>>, vector<1x1x8xf32>,
    return
  }
  func.func @transform_0(%arg0: i32) -> (i32, i32) {
    %c0_i32 = arith.constant 0 : i32
    %c0_i32_0 = arith.constant 0 : i32
    return %arg0, %c0_i32 : i32, i32
  }
  func.func @transform_1(%arg0: i32) -> (i32, i32) {
    %c0_i32 = arith.constant 0 : i32
    %c0_i32_0 = arith.constant 0 : i32
    %c0_i32_1 = arith.constant 0 : i32
    return %c0_i32, %c0_i32_0 : i32, i32
  }
  func.func @transform_2(%arg0: i32) -> i32 {
    %c0_i32 = arith.constant 0 : i32
    %c0_i32_0 = arith.constant 0 : i32
    return %c0_i32 : i32
  }
  func.func @transform_3(%arg0: i32) -> (i32, i32, i32) {
    %c0_i32 = arith.constant 0 : i32
    %c0_i32_0 = arith.constant 0 : i32
    %c0_i32_1 = arith.constant 0 : i32
    return %arg0, %c0_i32, %c0_i32_0 : i32, i32, i32
  }
}

</mosaic_0001>

<llo_original>
// kernel: tpu_custom_call.1
$region0: #{tpu_custom_call.1}
  #allocation0 [shape = 'u32[]', space=smem, size = 0x4, offset = 0x4, fixed_abs, tag = 'smem constant byte address 0x4 - core index']
  #allocation1 [shape = 'u32[144,128]{1,0:T(1,128)}', space=vmem, size = 0x12000, scoped, tag = 'internal scratch']
  #allocation2 [shape = 'f32[1]{0:T(128)S(6)}', space=smem, size = 0x200, scoped, tag = 'scoped memory for tpu_custom_call.1']
  %s0 = inlined_call_operand.hbm [shape: f32[8,32], index: 0, kind: input, shape index: {}]
  %s1 = inlined_call_operand.vmem [shape: f32[1,32], index: 1, kind: input, shape index: {}]
  %s2 = inlined_call_operand.<no memory space> [shape: f32[1], index: 2, kind: input, shape index: {}]
  %s3 = inlined_call_operand.hbm [shape: f32[1,1,8], index: 3, kind: output, shape index: {}]
  %s4 = sld [smem:[#allocation0]]
  $region26: #{tpu_custom_call.1} parent=0
    _
  %s6 = ssub.s32 1, %s4
  %s7 = scalar_select 0, %s6, %s4
  %8 = sst [smem:[#allocation2]] %s2
  $region1: #{tpu_custom_call.1} parent=0
    #allocation3 [shape = 'u8[4096]{0}', space=vmem, size = 0x1000, scoped, tag = 'input window, operand 0, single buffered']
    #allocation4 [shape = 's32[1]{0}', space=sflag, size = 0x4, scoped, tag = 'scoped memory for tpu_custom_call.1']
    #allocation5 [shape = 's32[1]{0}', space=sflag, size = 0x4, scoped, tag = 'scoped memory for tpu_custom_call.1']
    #allocation6 [shape = 'u8[512]{0}', space=vmem, size = 0x400, scoped, tag = 'output window, operand 0, single buffered']
    %9 = vsyncpa [#allocation4], 0
    %10 = vsyncpa [#allocation5], 0
    // Predicated region
    $region2: #{tpu_custom_call.1} parent=1 // pred_check
      _
    $region3: #{tpu_custom_call.1} parent=1 // pred_check_branch
      %12 = sbr.rel (0) target = $region5
    $region4: #{tpu_custom_call.1} parent=1 // pred_region
      %s14 = ssub.s32 128, 128
      %15 = vsyncadd [#allocation4], %s14
      %s17 = sshll.u32 [#allocation3], 4
      %s18 = int_to_ptr.vmem [resolvable:$true] %s17
      %20 = dma.hbm_to_vmem [thread:$0]  %s0, 128, %s18, [#allocation4]
    $region5: #{tpu_custom_call.1} parent=1 // pred_fallthru
      _
    // Predicated region
    $region6: #{tpu_custom_call.1} parent=1 // pred_check
      _
    $region7: #{tpu_custom_call.1} parent=1 // pred_check_branch
      %22 = sbr.rel (0) target = $region9
    $region8: #{tpu_custom_call.1} parent=1 // pred_region
      _
    $region9: #{tpu_custom_call.1} parent=1 // pred_fallthru
      _
    // Predicated region
    $region10: #{tpu_custom_call.1} parent=1 // pred_check
      _
    $region11: #{tpu_custom_call.1} parent=1 // pred_check_branch
      %24 = sbr.rel (0) target = $region13
    $region12: #{tpu_custom_call.1} parent=1 // pred_region
      _
    $region13: #{tpu_custom_call.1} parent=1 // pred_fallthru
      _
    // Predicated region
    $region14: #{tpu_custom_call.1} parent=1 // pred_check
      _
    $region15: #{tpu_custom_call.1} parent=1 // pred_check_branch
      %26 = sbr.rel (0) target = $region17
    $region16: #{tpu_custom_call.1} parent=1 // pred_region
      %27 = dma.done [#allocation4], 128
    $region17: #{tpu_custom_call.1} parent=1 // pred_fallthru
      _
    %v28 = vld [vmem:[#allocation3] sm:$0xff]
    %v29 = vld [vmem:[%s1] sm:$0x1]
    %v31 = vlaneseq
    %v32 = vshrl.u32 %v31, 7
    %v33 = vsub.s32 0, %v32
    %v34 = vrot.slane %v29, %v33
    %v36 = vmul.f32 %v28, %v34
    %vm37 = vcmask 261120
    %v38 = vsel %vm37, %v36, 0.0
    %39 = vadd.xlane.f32.xlu0 %v38
    %v40 = vpop.xlane.xlu0 %39
    %s41 = sld [smem:[#allocation2]]
    %v42 = vstv %s41
    %v43 = vadd.f32 %v40, %v42
    %v44 = vxor.u32 %v43, 2147483648
    %v45 = vmul.f32 %v44, 1.442695
    %v46 = vpow.pop %v45
    %v47 = vadd.f32 %v46, 1.0
    %v48 = vrcp.pop %v47
    %v49 = vmul.f32 1.0, %v48
    %v51 = vlaneseq
    %v52 = vand.u32 %v51, 127
    %v53 = vlaneseq
    %v54 = vshrl.u32 %v53, 7
    %v55 = vsub.s32 %v52, %v54
    %v56 = vrot.slane %v49, %v55
    %vm58 = vcmask 57344
    %59 = vst.msk [vmem:[#allocation6] sm:$0x1] %vm58, %v56
    // Predicated region
    $region18: #{tpu_custom_call.1} parent=1 // pred_check
      _
    $region19: #{tpu_custom_call.1} parent=1 // pred_check_branch
      %61 = sbr.rel (0) target = $region21
    $region20: #{tpu_custom_call.1} parent=1 // pred_region
      %s63 = ssub.s32 16, 16
      %64 = vsyncadd [#allocation5], %s63
      %s66 = sshll.u32 [#allocation6], 4
      %s67 = int_to_ptr.vmem [resolvable:$true] %s66
      %69 = dma.vmem_to_hbm [thread:$0]  %s67, 16, %s3, [#allocation5]
    $region21: #{tpu_custom_call.1} parent=1 // pred_fallthru
      _
    // Predicated region
    $region22: #{tpu_custom_call.1} parent=1 // pred_check
      _
    $region23: #{tpu_custom_call.1} parent=1 // pred_check_branch
      %71 = sbr.rel (0) target = $region25
    $region24: #{tpu_custom_call.1} parent=1 // pred_region
      %72 = dma.done [#allocation5], 16
    $region25: #{tpu_custom_call.1} parent=1 // pred_fallthru
      _
    %73 = vsyncpa [#allocation4], 1
    %74 = vsyncpa [#allocation5], 1

</llo_original>
